<compile_context>
chip_gen: v7x
topology: tpu7x:2x2x1
jax: 0.10.0
libtpu: 0.0.40
codegen_flags: <defaults>
</compile_context>

<pallas_src>
import jax
import jax.numpy as jnp
from jax.experimental import pallas as pl
from jax.experimental.pallas import tpu as pltpu


def _round_up(x, m):
    return ((x + m - 1) // m) * m


def _cdiv(a, b):
    return (a + b - 1) // b


# ----------------------------------------------------------------------------
# Pallas kernel 1: AffineTransform.forward (per-pixel 3x4 affine color transform)
# ----------------------------------------------------------------------------
def _affine_fwd_kernel(p_ref, x_ref, o_ref):
    # p_ref: (TB, 3, 4) float32  -- per-example affine matrices
    # x_ref: (TB, 3, TP)         -- pixels (channels on sublanes, pixels on lanes)
    # o_ref: (TB, 3, TP)         -- same dtype as the input image
    p = p_ref[...].astype(jnp.float32)                 # (TB, 3, 4)
    x = x_ref[...].astype(jnp.float32)                 # (TB, 3, TP)
    out = (p[:, :, 0:1] * x[:, 0:1, :]
           + p[:, :, 1:2] * x[:, 1:2, :]
           + p[:, :, 2:3] * x[:, 2:3, :]
           + p[:, :, 3:4])                             # bias, broadcast over lanes
    o_ref[...] = out.astype(o_ref.dtype)


def affine_forward_pallas(xform_params, x, *, tp_max=8192, tb_max=16):
    """out[n,c,w,h] = sum_k params[n,c,k] * x[n,k,w,h] + params[n,c,3] (dtype of x)."""
    N, C, W, H = x.shape
    assert C == 3, "AffineTransform operates on 3-channel (color) inputs"
    assert xform_params.shape == (N, 3, 4)

    P = W * H
    out_dtype = x.dtype                                   # no f32 promotion of the write

    # Lane-dense spatial tiles (multiple of 128).  Ragged final blocks are fine:
    # reads of the over-hang are garbage but the corresponding writes are masked.
    TP = min(tp_max, _round_up(P, 128))
    TB = min(N, tb_max)
    grid_p = _cdiv(P, TP)
    grid_n = _cdiv(N, TB)

    x2 = x.reshape(N, 3, P)                               # free (contiguous) reshape
    p = xform_params.astype(jnp.float32)

    # VMEM budget: channel dim 3 pads to 8 sublanes; everything double-buffered.
    itemsize = x.dtype.itemsize
    blk_in = TB * 8 * TP * itemsize
    blk_out = TB * 8 * TP * jnp.dtype(out_dtype).itemsize
    blk_p = TB * 8 * 128 * 4                              # (3,4) pads to (8,128), f32
    vmem_limit = 2 * (blk_in + blk_out + blk_p) + (4 << 20)
    vmem_limit = int(min(max(vmem_limit, 16 << 20), 48 << 20))   # fits v7x 64 MiB/TC

    out = pl.pallas_call(
        _affine_fwd_kernel,
        out_shape=jax.ShapeDtypeStruct((N, 3, P), out_dtype),
        grid_spec=pltpu.PrefetchScalarGridSpec(
            num_scalar_prefetch=0,
            # Spatial tiles lead the grid -> even megacore split on v7x for small N.
            grid=(grid_p, grid_n),
            in_specs=[
                pl.BlockSpec((TB, 3, 4), lambda j, i: (i, 0, 0)),    # params (tiny)
                pl.BlockSpec((TB, 3, TP), lambda j, i: (i, 0, j)),   # pixels
            ],
            out_specs=pl.BlockSpec((TB, 3, TP), lambda j, i: (i, 0, j)),
        ),
        compiler_params=pltpu.CompilerParams(
            dimension_semantics=("parallel", "parallel"),
            vmem_limit_bytes=vmem_limit,
        ),
    )(p, x2)

    return out.reshape(N, 3, W, H)


# ----------------------------------------------------------------------------
# Pallas kernel 2: fold_mask (row-wise masked select) used by merge_xform
# ----------------------------------------------------------------------------
def _fold_mask_kernel(mask_ref, self_ref, other_ref, out_ref):
    # mask_ref : (TN, 1) int32  -- 1 => keep self row, 0 => keep other row
    keep_self = mask_ref[...] != 0                        # broadcasts over lanes
    out_ref[...] = jnp.where(keep_self, self_ref[...], other_ref[...])


def fold_mask_pallas(self_params, other_params, self_mask, *,
                     min_pallas_elems=4096, tn_max=256, td_max=2048):
    """new_params[i] = self_params[i] if self_mask[i] else other_params[i] (native dtype)."""
    assert self_params.shape == other_params.shape
    assert self_params.dtype == other_params.dtype
    assert self_params.shape[0] == self_mask.shape[0]

    n = self_params.shape[0]
    param_shape = self_params.shape[1:]
    d = 1
    for s in param_shape:
        d *= int(s)

    keep = (self_mask != 0)

    # Tiny inputs (e.g. AffineTransform params: N x 3 x 4): launch overhead dominates,
    # let XLA's fused select handle it.
    if n * d <= min_pallas_elems:
        bshape = (n,) + (1,) * len(param_shape)
        return jnp.where(keep.reshape(bshape), self_params, other_params)

    dtype = self_params.dtype
    a = self_params.reshape(n, d)
    b = other_params.reshape(n, d)
    m = keep.astype(jnp.int32).reshape(n, 1)

    # Tile sizes satisfy the (8,128) rule either by divisibility or by equalling the
    # full dim; ragged final blocks handled by the cdiv grid (no pads, no slices).
    tn = n if n <= tn_max else tn_max            # tn_max multiple of 8
    td = d if d <= td_max else td_max            # td_max multiple of 128
    grid = (_cdiv(n, tn), _cdiv(d, td))

    blk = _round_up(tn, 8) * _round_up(td, 128) * jnp.dtype(dtype).itemsize
    mask_blk = _round_up(tn, 8) * 128 * 4
    vmem_limit = 2 * (3 * blk + mask_blk) + (4 << 20)
    vmem_limit = int(min(max(vmem_limit, 16 << 20), 48 << 20))

    out = pl.pallas_call(
        _fold_mask_kernel,
        out_shape=jax.ShapeDtypeStruct((n, d), dtype),
        grid_spec=pltpu.PrefetchScalarGridSpec(
            num_scalar_prefetch=0,
            grid=grid,
            in_specs=[
                pl.BlockSpec((tn, 1), lambda i, j: (i, 0)),     # mask column
                pl.BlockSpec((tn, td), lambda i, j: (i, j)),    # self params
                pl.BlockSpec((tn, td), lambda i, j: (i, j)),    # other params
            ],
            out_specs=pl.BlockSpec((tn, td), lambda i, j: (i, j)),
        ),
        compiler_params=pltpu.CompilerParams(
            dimension_semantics=("parallel", "parallel"),
            vmem_limit_bytes=vmem_limit,
        ),
    )(m, a, b)

    return out.reshape((n,) + param_shape)


# ----------------------------------------------------------------------------
# JAX mirrors of the PyTorch modules
# ----------------------------------------------------------------------------
def batchwise_norm(x, lp='inf'):
    flat = x.reshape(x.shape[0], -1)
    if lp == 'inf':
        return jnp.max(jnp.abs(flat), axis=1)
    return jnp.sum(jnp.abs(flat) ** lp, axis=1) ** (1.0 / lp)


class ParameterizedTransformation:
    """JAX mirror of the abstract base class."""

    def __init__(self, manual_gpu=None, **kwargs):
        self.use_gpu = bool(manual_gpu) if manual_gpu is not None else False

    def clone(self, shape=None, example_index=None):
        raise NotImplementedError()

    def norm(self, lp='inf'):
        raise NotImplementedError("Need to call subclass's norm!")

    @classmethod
    def identity_params(cls, shape):
        raise NotImplementedError("Need to call subclass's identity_params!")

    def merge_xform(self, other, self_mask):
        assert self.__class__ == other.__class__
        self_params = self.xform_params
        other_params = other.xform_params
        assert self_params.shape == other_params.shape
        assert self_params.shape[0] == self_mask.shape[0]
        assert other_params.shape[0] == self_mask.shape[0]

        new_params = fold_mask_pallas(self_params, other_params, self_mask)
        return self.__class__(shape=self.img_shape, params=new_params,
                              manual_gpu=self.use_gpu)

    def forward(self, examples):
        raise NotImplementedError("Need to call subclass's forward!")


class AffineTransform(ParameterizedTransformation):
    """Per-example 3x4 affine color transform (params shape: N x 3 x 4)."""

    def __init__(self, shape, params=None, manual_gpu=None, **kwargs):
        super().__init__(manual_gpu=manual_gpu)
        self.img_shape = shape
        self.xform_params = params if params is not None else self.identity_params(shape)

    def clone(self, shape=None, example_index=None):
        shape = shape or self.img_shape
        if example_index is None:
            my_params = self.xform_params
        else:
            my_params = self.xform_params[example_index][None]
        params = jnp.broadcast_to(my_params, (shape[0],) + tuple(my_params.shape[1:]))
        return AffineTransform(shape=shape, params=params, manual_gpu=self.use_gpu)

    def identity_params(self, shape):
        n = shape[0]
        p = jnp.zeros((n, 3, 4), dtype=jnp.float32)
        p = p.at[:, 0, 0].set(1.0).at[:, 1, 1].set(1.0).at[:, 2, 2].set(1.0)
        return p

    def norm(self, lp='inf'):
        return batchwise_norm(self.xform_params - self.identity_params(self.img_shape), lp)

    def project_params(self, lp, lp_bound):
        # TODO(synk): plain-JAX stand-in for utils.batchwise_lp_project (lp='inf' or int p).
        diff = self.xform_params - self.identity_params(self.img_shape)
        flat = diff.reshape(diff.shape[0], -1)
        if lp == 'inf':
            new_flat = jnp.clip(flat, -lp_bound, lp_bound)
        else:
            norms = jnp.sum(jnp.abs(flat) ** lp, axis=1, keepdims=True) ** (1.0 / lp)
            new_flat = flat * jnp.minimum(1.0, lp_bound / jnp.maximum(norms, 1e-12))
        self.xform_params = self.xform_params + (new_flat.reshape(diff.shape) - diff)

    def forward(self, x):
        return affine_forward_pallas(self.xform_params, x)


# ----------------------------------------------------------------------------
# Demo / self-test
# ----------------------------------------------------------------------------
if __name__ == "__main__":
    key = jax.random.PRNGKey(0)
    k1, k2, k3, k4, k5, k6, k7 = jax.random.split(key, 7)

    # ---- 1) AffineTransform.forward, f32, tiles divide exactly ----
    N, C, W, H = 2, 3, 16, 16
    img_shape = (N, C, W, H)
    x = jax.random.normal(k1, img_shape, dtype=jnp.float32)

    xform_a = AffineTransform(shape=img_shape)
    xform_a.xform_params = xform_a.xform_params + 0.1 * jax.random.normal(
        k2, (N, 3, 4), dtype=jnp.float32)

    y = jax.block_until_ready(xform_a.forward(x))
    p = xform_a.xform_params
    y_ref = jnp.einsum('nck,nkwh->ncwh', p[:, :, :3], x) + p[:, :, 3][:, :, None, None]
    assert y.shape == img_shape and y.dtype == x.dtype
    assert jnp.allclose(y, y_ref, atol=1e-5, rtol=1e-5), "affine forward mismatch"

    # identity params reproduce the input
    xform_id = AffineTransform(shape=img_shape)
    y_id = jax.block_until_ready(xform_id.forward(x))
    assert jnp.allclose(y_id, x, atol=1e-6), "identity transform mismatch"

    # ---- 2) Ragged grid path (no wrapper pads): P and N not multiples of the tiles ----
    N2, W2, H2 = 5, 20, 20
    x_rag = jax.random.normal(k3, (N2, 3, W2, H2), dtype=jnp.float32)
    p_rag = 0.3 * jax.random.normal(k4, (N2, 3, 4), dtype=jnp.float32)
    y_rag = jax.block_until_ready(affine_forward_pallas(p_rag, x_rag, tb_max=4))
    y_rag_ref = (jnp.einsum('nck,nkwh->ncwh', p_rag[:, :, :3], x_rag)
                 + p_rag[:, :, 3][:, :, None, None])
    assert jnp.allclose(y_rag, y_rag_ref, atol=1e-5, rtol=1e-5), "ragged affine mismatch"

    # ---- 3) bf16 input stays bf16 (no f32 output promotion) ----
    xb = x.astype(jnp.bfloat16)
    yb = jax.block_until_ready(xform_a.forward(xb))
    assert yb.dtype == jnp.bfloat16, "output dtype was promoted"
    yb_ref = (jnp.einsum('nck,nkwh->ncwh', p[:, :, :3], xb.astype(jnp.float32))
              + p[:, :, 3][:, :, None, None])
    assert jnp.allclose(yb.astype(jnp.float32), yb_ref, atol=5e-2, rtol=2e-2), \
        "bf16 affine mismatch"

    # ---- 4) merge_xform (tiny params -> fused-select fast path) ----
    xform_b = AffineTransform(
        shape=img_shape, params=jax.random.normal(k5, (N, 3, 4), dtype=jnp.float32))
    mask = jnp.array([1, 0], dtype=jnp.int32)
    merged = xform_a.merge_xform(xform_b, mask)
    m_out = jax.block_until_ready(merged.xform_params)
    m_ref = jnp.where(mask.reshape(N, 1, 1) != 0, xform_a.xform_params, xform_b.xform_params)
    assert jnp.allclose(m_out, m_ref), "merge_xform mismatch"

    # ---- 5) fold_mask Pallas path (tiled select, ragged lane dim, native bf16) ----
    Nb, Cb, Wb, Hb = 70, 4, 30, 30
    pa = jax.random.normal(k6, (Nb, Cb, Wb, Hb), dtype=jnp.float32).astype(jnp.bfloat16)
    pb = jax.random.normal(k7, (Nb, Cb, Wb, Hb), dtype=jnp.float32).astype(jnp.bfloat16)
    mb = (jnp.arange(Nb) % 2).astype(jnp.int32)
    fm = jax.block_until_ready(fold_mask_pallas(pa, pb, mb))
    fm_ref = jnp.where(mb.reshape(Nb, 1, 1, 1) != 0, pa, pb)
    assert fm.dtype == jnp.bfloat16, "fold_mask changed dtype"
    assert jnp.array_equal(fm, fm_ref), "fold_mask (pallas path) mismatch"

    print("KERNEL_OK")
</pallas_src>

<mosaic_0001>
module attributes {stable_mosaic.version = 11 : i64} {
  func.func @_affine_fwd_kernel(%arg0: i32, %arg1: i32, %arg2: memref<2x3x4xf32, #tpu.memory_space<vmem>>, %arg3: memref<2x3x256xf32, #tpu.memory_space<vmem>>, %arg4: memref<2x3x256xf32, #tpu.memory_space<vmem>>) attributes {dimension_semantics = [#tpu.dimension_semantics<parallel>, #tpu.dimension_semantics<parallel>], iteration_bounds = array<i64: 1, 1>, scalar_prefetch = 0 : i64, scratch_operands = 0 : i64, tpu.core_type = #tpu.core_type<tc>, window_params = [{transform_indices = @transform_0, window_bounds = array<i64: 2, 3, 4>}, {transform_indices = @transform_1, window_bounds = array<i64: 2, 3, 256>}, {transform_indices = @transform_2, window_bounds = array<i64: 2, 3, 256>}]} {
    %c0 = arith.constant 0 : index
    %c0_0 = arith.constant 0 : index
    %c0_1 = arith.constant 0 : index
    %0 = vector.load %arg2[%c0, %c0_0, %c0_1] : memref<2x3x4xf32, #tpu.memory_space<vmem>>, vector<2x3x4xf32>
    %c0_2 = arith.constant 0 : index
    %c0_3 = arith.constant 0 : index
    %c0_4 = arith.constant 0 : index
    %1 = vector.load %arg3[%c0_2, %c0_3, %c0_4] : memref<2x3x256xf32, #tpu.memory_space<vmem>>, vector<2x3x256xf32>
    %2 = vector.extract_strided_slice %0 {offsets = [0, 0, 0], sizes = [2, 3, 1], strides = [1, 1, 1]} : vector<2x3x4xf32> to vector<2x3x1xf32>
    %3 = vector.extract_strided_slice %1 {offsets = [0, 0, 0], sizes = [2, 1, 256], strides = [1, 1, 1]} : vector<2x3x256xf32> to vector<2x1x256xf32>
    %4 = vector.broadcast %2 : vector<2x3x1xf32> to vector<2x3x256xf32>
    %5 = vector.broadcast %3 : vector<2x1x256xf32> to vector<2x3x256xf32>
    %6 = arith.mulf %4, %5 : vector<2x3x256xf32>
    %7 = vector.extract_strided_slice %0 {offsets = [0, 0, 1], sizes = [2, 3, 1], strides = [1, 1, 1]} : vector<2x3x4xf32> to vector<2x3x1xf32>
    %8 = vector.extract_strided_slice %1 {offsets = [0, 1, 0], sizes = [2, 1, 256], strides = [1, 1, 1]} : vector<2x3x256xf32> to vector<2x1x256xf32>
    %9 = vector.broadcast %7 : vector<2x3x1xf32> to vector<2x3x256xf32>
    %10 = vector.broadcast %8 : vector<2x1x256xf32> to vector<2x3x256xf32>
    %11 = arith.mulf %9, %10 : vector<2x3x256xf32>
    %12 = arith.addf %6, %11 : vector<2x3x256xf32>
    %13 = vector.extract_strided_slice %0 {offsets = [0, 0, 2], sizes = [2, 3, 1], strides = [1, 1, 1]} : vector<2x3x4xf32> to vector<2x3x1xf32>
    %14 = vector.extract_strided_slice %1 {offsets = [0, 2, 0], sizes = [2, 1, 256], strides = [1, 1, 1]} : vector<2x3x256xf32> to vector<2x1x256xf32>
    %15 = vector.broadcast %13 : vector<2x3x1xf32> to vector<2x3x256xf32>
    %16 = vector.broadcast %14 : vector<2x1x256xf32> to vector<2x3x256xf32>
    %17 = arith.mulf %15, %16 : vector<2x3x256xf32>
    %18 = arith.addf %12, %17 : vector<2x3x256xf32>
    %19 = vector.extract_strided_slice %0 {offsets = [0, 0, 3], sizes = [2, 3, 1], strides = [1, 1, 1]} : vector<2x3x4xf32> to vector<2x3x1xf32>
    %20 = vector.broadcast %19 : vector<2x3x1xf32> to vector<2x3x256xf32>
    %21 = arith.addf %18, %20 : vector<2x3x256xf32>
    %c0_5 = arith.constant 0 : index
    %c0_6 = arith.constant 0 : index
    %c0_7 = arith.constant 0 : index
    %22 = vector.load %arg4[%c0_5, %c0_6, %c0_7] : memref<2x3x256xf32, #tpu.memory_space<vmem>>, vector<2x3x256xf32>
    tpu.vector_store %arg4[%c0_5, %c0_6, %c0_7], %21 {strides = array<i32>} : memref<2x3x256xf32, #tpu.memory_space<vmem>>, vector<2x3x256xf32>,
    return
  }
  func.func @transform_0(%arg0: i32, %arg1: i32) -> (i32, i32, i32) {
    %c0_i32 = arith.constant 0 : i32
    %c0_i32_0 = arith.constant 0 : i32
    %c0_i32_1 = arith.constant 0 : i32
    return %arg1, %c0_i32, %c0_i32_0 : i32, i32, i32
  }
  func.func @transform_1(%arg0: i32, %arg1: i32) -> (i32, i32, i32) {
    %c0_i32 = arith.constant 0 : i32
    %c0_i32_0 = arith.constant 0 : i32
    return %arg1, %c0_i32, %arg0 : i32, i32, i32
  }
  func.func @transform_2(%arg0: i32, %arg1: i32) -> (i32, i32, i32) {
    %c0_i32 = arith.constant 0 : i32
    %c0_i32_0 = arith.constant 0 : i32
    return %arg1, %c0_i32, %arg0 : i32, i32, i32
  }
}

</mosaic_0001>

<llo_original>
// kernel: tpu_custom_call.1
$region0: #{tpu_custom_call.1}
  #allocation0 [shape = 'u32[]', space=smem, size = 0x4, offset = 0x4, fixed_abs, tag = 'smem constant byte address 0x4 - core index']
  #allocation1 [shape = 'u32[144,128]{1,0:T(1,128)}', space=vmem, size = 0x12000, scoped, tag = 'internal scratch']
  %s0 = inlined_call_operand.vmem [shape: f32[2,3,4], index: 0, kind: input, shape index: {}]
  %s1 = inlined_call_operand.vmem [shape: f32[2,3,256], index: 1, kind: input, shape index: {}]
  %s2 = inlined_call_operand.vmem [shape: f32[2,3,256], index: 2, kind: output, shape index: {}]
  %s3 = sld [smem:[#allocation0]]
  $region18: #{tpu_custom_call.1} parent=0
    _
  %s5 = ssub.s32 1, %s3
  %s6 = scalar_select 0, %s5, %s3
  // Predicated region
  $region2: #{tpu_custom_call.1} parent=0 // pred_check
    _
  $region3: #{tpu_custom_call.1} parent=0 // pred_check_branch
    %8 = sbr.rel (0) target = $region5
  $region4: #{tpu_custom_call.1} parent=0 // pred_region
    _
  $region5: #{tpu_custom_call.1} parent=0 // pred_fallthru
    _
  // Predicated region
  $region6: #{tpu_custom_call.1} parent=0 // pred_check
    _
  $region7: #{tpu_custom_call.1} parent=0 // pred_check_branch
    %10 = sbr.rel (0) target = $region9
  $region8: #{tpu_custom_call.1} parent=0 // pred_region
    _
  $region9: #{tpu_custom_call.1} parent=0 // pred_fallthru
    _
  %v11 = vld [vmem:[%s0] sm:$0x7]
  %v12 = vld [vmem:[%s0 + $0x4] sm:$0x7]
  %v13 = vld [vmem:[%s1] sm:$0x77]
  %v14 = vld [vmem:[%s1 + $0x8] sm:$0x77]
  %16 = vset.pattern.permute.xlu0 0
  %17 = vperm.xlu0 %16, %v11
  %v18 = vpop.permute.xlu0 %17
  %21 = vset.pattern.permute.xlu0 0
  %22 = vperm.xlu0 %21, %v12
  %v23 = vpop.permute.xlu0 %22
  %v27 = vlaneseq
  %v28 = vshrl.u32 %v27, 7
  %v29 = vsub.s32 0, %v28
  %v30 = vrot.slane %v13, %v29
  %v31 = vlaneseq
  %v32 = vshrl.u32 %v31, 7
  %v33 = vsub.s32 4, %v32
  %v34 = vrot.slane %v13, %v33
  %v35 = vlaneseq
  %v36 = vshrl.u32 %v35, 7
  %v37 = vsub.s32 0, %v36
  %v38 = vrot.slane %v14, %v37
  %v39 = vlaneseq
  %v40 = vshrl.u32 %v39, 7
  %v41 = vsub.s32 4, %v40
  %v42 = vrot.slane %v14, %v41
  %v47 = vlaneseq
  %v48 = vshrl.u32 %v47, 7
  %v49 = vsub.s32 0, %v48
  %v50 = vrot.slane %v30, %v49
  %v51 = vlaneseq
  %v52 = vshrl.u32 %v51, 7
  %v53 = vsub.s32 0, %v52
  %v54 = vrot.slane %v34, %v53
  %v55 = vlaneseq
  %v56 = vshrl.u32 %v55, 7
  %v57 = vsub.s32 0, %v56
  %v58 = vrot.slane %v38, %v57
  %v59 = vlaneseq
  %v60 = vshrl.u32 %v59, 7
  %v61 = vsub.s32 0, %v60
  %v62 = vrot.slane %v42, %v61
  %v63 = vmul.f32 %v18, %v50
  %v64 = vmul.f32 %v18, %v54
  %v65 = vmul.f32 %v23, %v58
  %v66 = vmul.f32 %v23, %v62
  %67 = vset.pattern.permute.xlu0 1
  %68 = vperm.xlu0 %67, %v11
  %v69 = vpop.permute.xlu0 %68
  %71 = vset.pattern.permute.xlu0 1
  %72 = vperm.xlu0 %71, %v12
  %v73 = vpop.permute.xlu0 %72
  %v75 = vlaneseq
  %v76 = vshrl.u32 %v75, 7
  %v77 = vsub.s32 1, %v76
  %v78 = vrot.slane %v13, %v77
  %v79 = vlaneseq
  %v80 = vshrl.u32 %v79, 7
  %v81 = vsub.s32 5, %v80
  %v82 = vrot.slane %v13, %v81
  %v83 = vlaneseq
  %v84 = vshrl.u32 %v83, 7
  %v85 = vsub.s32 1, %v84
  %v86 = vrot.slane %v14, %v85
  %v87 = vlaneseq
  %v88 = vshrl.u32 %v87, 7
  %v89 = vsub.s32 5, %v88
  %v90 = vrot.slane %v14, %v89
  %v95 = vlaneseq
  %v96 = vshrl.u32 %v95, 7
  %v97 = vsub.s32 1, %v96
  %v98 = vrot.slane %v78, %v97
  %v99 = vlaneseq
  %v100 = vshrl.u32 %v99, 7
  %v101 = vsub.s32 1, %v100
  %v102 = vrot.slane %v82, %v101
  %v103 = vlaneseq
  %v104 = vshrl.u32 %v103, 7
  %v105 = vsub.s32 1, %v104
  %v106 = vrot.slane %v86, %v105
  %v107 = vlaneseq
  %v108 = vshrl.u32 %v107, 7
  %v109 = vsub.s32 1, %v108
  %v110 = vrot.slane %v90, %v109
  %v111 = vmul.f32 %v69, %v98
  %v112 = vmul.f32 %v69, %v102
  %v113 = vmul.f32 %v73, %v106
  %v114 = vmul.f32 %v73, %v110
  %v115 = vadd.f32 %v63, %v111
  %v116 = vadd.f32 %v64, %v112
  %v117 = vadd.f32 %v65, %v113
  %v118 = vadd.f32 %v66, %v114
  %119 = vset.pattern.permute.xlu0 2
  %120 = vperm.xlu0 %119, %v11
  %v121 = vpop.permute.xlu0 %120
  %123 = vset.pattern.permute.xlu0 2
  %124 = vperm.xlu0 %123, %v12
  %v125 = vpop.permute.xlu0 %124
  %v127 = vlaneseq
  %v128 = vshrl.u32 %v127, 7
  %v129 = vsub.s32 2, %v128
  %v130 = vrot.slane %v13, %v129
  %v131 = vlaneseq
  %v132 = vshrl.u32 %v131, 7
  %v133 = vsub.s32 6, %v132
  %v134 = vrot.slane %v13, %v133
  %v135 = vlaneseq
  %v136 = vshrl.u32 %v135, 7
  %v137 = vsub.s32 2, %v136
  %v138 = vrot.slane %v14, %v137
  %v139 = vlaneseq
  %v140 = vshrl.u32 %v139, 7
  %v141 = vsub.s32 6, %v140
  %v142 = vrot.slane %v14, %v141
  %v147 = vlaneseq
  %v148 = vshrl.u32 %v147, 7
  %v149 = vsub.s32 2, %v148
  %v150 = vrot.slane %v130, %v149
  %v151 = vlaneseq
  %v152 = vshrl.u32 %v151, 7
  %v153 = vsub.s32 2, %v152
  %v154 = vrot.slane %v134, %v153
  %v155 = vlaneseq
  %v156 = vshrl.u32 %v155, 7
  %v157 = vsub.s32 2, %v156
  %v158 = vrot.slane %v138, %v157
  %v159 = vlaneseq
  %v160 = vshrl.u32 %v159, 7
  %v161 = vsub.s32 2, %v160
  %v162 = vrot.slane %v142, %v161
  %v163 = vmul.f32 %v121, %v150
  %v164 = vmul.f32 %v121, %v154
  %v165 = vmul.f32 %v125, %v158
  %v166 = vmul.f32 %v125, %v162
  %v167 = vadd.f32 %v115, %v163
  %v168 = vadd.f32 %v116, %v164
  %v169 = vadd.f32 %v117, %v165
  %v170 = vadd.f32 %v118, %v166
  %171 = vset.pattern.permute.xlu0 3
  %172 = vperm.xlu0 %171, %v11
  %v173 = vpop.permute.xlu0 %172
  %175 = vset.pattern.permute.xlu0 3
  %176 = vperm.xlu0 %175, %v12
  %v177 = vpop.permute.xlu0 %176
  %v179 = vadd.f32 %v167, %v173
  %v180 = vadd.f32 %v168, %v173
  %v181 = vadd.f32 %v169, %v177
  %v182 = vadd.f32 %v170, %v177
  %v187 = vcombine.low %v179, %v180
  %v188 = vcombine.low %v181, %v182
  %191 = vst [vmem:[%s2] sm:$0x77] %v187
  %192 = vst [vmem:[%s2 + $0x8] sm:$0x77] %v188
  // Predicated region
  $region10: #{tpu_custom_call.1} parent=0 // pred_check
    _
  $region11: #{tpu_custom_call.1} parent=0 // pred_check_branch
    %194 = sbr.rel (0) target = $region13
  $region12: #{tpu_custom_call.1} parent=0 // pred_region
    _
  $region13: #{tpu_custom_call.1} parent=0 // pred_fallthru
    _
  // Predicated region
  $region14: #{tpu_custom_call.1} parent=0 // pred_check
    _
  $region15: #{tpu_custom_call.1} parent=0 // pred_check_branch
    %196 = sbr.rel (0) target = $region17
  $region16: #{tpu_custom_call.1} parent=0 // pred_region
    _
  $region17: #{tpu_custom_call.1} parent=0 // pred_fallthru
    _

</llo_original>
